<compile_context>
chip_gen: v5e
topology: v5e:2x2
jax: 0.10.0
libtpu: 0.0.40
codegen_flags: <defaults>
</compile_context>

<pallas_src>
from functools import partial

import jax
import jax.numpy as jnp
from jax import lax
from jax.experimental import pallas as pl
from jax.experimental.pallas import tpu as pltpu


# ----------------------------- Pallas kernel --------------------------------
def _fused_cnn_kernel(x_ref, w1_ref, b1_ref, w2_ref, b2_ref,
                      fw1_ref, fb1_ref, fw2_ref, fb2_ref, o_ref):
    acc_t = jnp.float32

    # conv1 as dense GEMM: (bt,80) @ (80,256); cols = (corner dy,dx | py,px | ch)
    h1 = jnp.dot(x_ref[...], w1_ref[...], preferred_element_type=acc_t) + b1_ref[...]
    h1 = jnp.maximum(h1, 0.0)

    # 2x2 max-pool: exact elementwise max over the four 64-lane corner groups
    # (the full conv1 output is computed; the permuted columns just make the
    # pool a contiguous group max -- valid regardless of padding or sign).
    p1 = jnp.maximum(jnp.maximum(h1[:, 0:64], h1[:, 64:128]),
                     jnp.maximum(h1[:, 128:192], h1[:, 192:256]))
    p1 = p1.astype(w2_ref.dtype)

    # conv2 as dense GEMM: (bt,64) @ (64,128); cols = (oy,ox | ch)
    h2 = jnp.dot(p1, w2_ref[...], preferred_element_type=acc_t) + b2_ref[...]
    h2 = jnp.maximum(h2, 0.0)

    # second 2x2 max-pool (-> 1x1 spatial) == max over four 32-lane groups.
    p2 = jnp.maximum(jnp.maximum(h2[:, 0:32], h2[:, 32:64]),
                     jnp.maximum(h2[:, 64:96], h2[:, 96:128]))
    p2 = p2.astype(fw1_ref.dtype)

    # fc1 + relu
    h3 = jnp.maximum(
        jnp.dot(p2, fw1_ref[...], preferred_element_type=acc_t) + fb1_ref[...], 0.0)
    h3 = h3.astype(fw2_ref.dtype)

    # fc2 (N padded 6 -> 8; narrow store, but 16x fewer output bytes than 128)
    o_ref[...] = (jnp.dot(h3, fw2_ref[...], preferred_element_type=acc_t)
                  + fb2_ref[...]).astype(o_ref.dtype)


# ------------------- host-side (weights-only) repacking ---------------------
def _conv3x3_as_matrix(w, h, ww, pad=1, input_layout="hwc"):
    """Unroll a stride-1 3x3 conv with zero padding over an h x ww map into a
    dense matrix M with output flattening (oy, ox, co).  input_layout picks the
    input flattening: "hwc" -> (iy, ix, ci), "chw" -> (ci, iy, ix) (i.e. NCHW
    flat rows), so the row permutation lives in the tiny weight matrix."""
    cout, cin, kh, kw = w.shape
    if input_layout == "chw":
        m = jnp.zeros((cin, h, ww, h, ww, cout), w.dtype)
    else:
        m = jnp.zeros((h, ww, cin, h, ww, cout), w.dtype)
    for ky in range(kh):
        for kx in range(kw):
            for oy in range(h):
                for ox in range(ww):
                    iy, ix = oy + ky - pad, ox + kx - pad
                    if 0 <= iy < h and 0 <= ix < ww:
                        if input_layout == "chw":
                            m = m.at[:, iy, ix, oy, ox, :].set(w[:, :, ky, kx].T)
                        else:
                            m = m.at[iy, ix, :, oy, ox, :].set(w[:, :, ky, kx].T)
    return m.reshape(h * ww * cin, h * ww * cout)


def _prepare_packed_params(params, compute_dtype):
    w1, b1 = params["conv1_w"], params["conv1_b"]
    w2, b2 = params["conv2_w"], params["conv2_b"]
    fw1, fb1 = params["fc1_w"], params["fc1_b"]
    fw2, fb2 = params["fc2_w"], params["fc2_b"]

    # conv1: (80 -> 256) dense GEMM with NCHW-ordered rows (no wrapper
    # transpose needed); output columns permuted from (oy,ox,c) to
    # (corner dy,dx | pooled py,px | c) so the pool is a max over contiguous
    # 64-lane groups.
    m1 = _conv3x3_as_matrix(w1, 4, 4, input_layout="chw")    # (80, 256)
    m1 = m1.reshape(80, 2, 2, 2, 2, 16)                      # (k, py, dy, px, dx, c)
    m1 = jnp.transpose(m1, (0, 2, 4, 1, 3, 5)).reshape(80, 256)
    b1_big = jnp.tile(b1, 16).reshape(1, 256)                # col % 16 == channel

    # conv2 on the pooled 2x2 map: (64 -> 128) dense GEMM, rows/cols (oy,ox,c).
    m2 = _conv3x3_as_matrix(w2, 2, 2, input_layout="hwc")    # (64, 128)
    b2_big = jnp.tile(b2, 4).reshape(1, 128)                 # col % 32 == channel

    # fc1 / fc2 (fc2 N padded only 6 -> 8 to minimize output HBM bytes).
    fw1_t = jnp.transpose(fw1)                               # (32, 64)
    fw2_t = jnp.zeros((64, 8), fw2.dtype).at[:, :6].set(jnp.transpose(fw2))
    fb2_p = jnp.zeros((1, 8), fb2.dtype).at[0, :6].set(fb2)

    cd = compute_dtype
    return (m1.astype(cd), b1_big.astype(jnp.float32),
            m2.astype(cd), b2_big.astype(jnp.float32),
            fw1_t.astype(cd), fb1.reshape(1, 64).astype(jnp.float32),
            fw2_t.astype(cd), fb2_p.astype(jnp.float32))


def _round_up(n, m):
    return (n + m - 1) // m * m


def _cdiv(a, b):
    return -(-a // b)


# ------------------------------- forward -------------------------------------
@partial(jax.jit, static_argnames=("compute_dtype", "block_rows"))
def urban_scene_cnn_forward(x, params, *, compute_dtype=jnp.float32,
                            block_rows=4096):
    B = x.shape[0]
    packed = _prepare_packed_params(params, compute_dtype)

    # Row-tile selection: balance block count vs batch padding, keep bt a
    # multiple of 16, and for big batches keep >=2 (ideally >=4) blocks so
    # v7x's two TensorCores both get work (harmless on 1-TC chips).
    nblocks = max(1, _cdiv(B, block_rows))
    if B >= 4096:
        nblocks = max(nblocks, 4)
    elif B >= 1024:
        nblocks = max(nblocks, 2)
    bt = _round_up(_cdiv(B, nblocks), 16)
    b_pad = _round_up(B, bt)

    # Input: NCHW flat rows directly (the (ci,iy,ix) permutation lives in m1's
    # rows).  K stays 80 -- a (bt, 80) block is legal because the last block
    # dim equals the full array dim.  Only the batch is padded.
    xf = x.reshape(B, 5 * 4 * 4).astype(compute_dtype)
    xf = jnp.pad(xf, ((0, b_pad - B), (0, 0)))

    out_dtype = compute_dtype
    grid = (b_pad // bt,)
    row_spec = pl.BlockSpec((bt, 80), lambda i: (i, 0))
    const_specs = [pl.BlockSpec(p.shape, lambda i: (0, 0)) for p in packed]

    in_itemsize = jnp.dtype(compute_dtype).itemsize
    flops = 2 * b_pad * (80 * 256 + 64 * 128 + 32 * 64 + 64 * 8)
    bytes_accessed = (int(xf.size) * in_itemsize
                      + b_pad * 8 * jnp.dtype(out_dtype).itemsize
                      + sum(int(p.size) * p.dtype.itemsize for p in packed))

    out = pl.pallas_call(
        _fused_cnn_kernel,
        out_shape=jax.ShapeDtypeStruct((b_pad, 8), out_dtype),
        grid=grid,
        in_specs=[row_spec] + const_specs,
        out_specs=pl.BlockSpec((bt, 8), lambda i: (i, 0)),
        compiler_params=pltpu.CompilerParams(
            dimension_semantics=("parallel",),
            vmem_limit_bytes=32 * 1024 * 1024),
        cost_estimate=pl.CostEstimate(flops=flops, transcendentals=0,
                                      bytes_accessed=bytes_accessed),
    )(xf, *packed)

    # NOTE: padded batch rows (B..b_pad) hold garbage (bias->ReLU propagates
    # through the net); they must never be consumed -- only out[:B] is valid.
    return out[:B, :6].astype(jnp.float32)


# --------------------------- pure-JAX reference ------------------------------
def reference_forward(x, params):
    w1, b1 = params["conv1_w"], params["conv1_b"]
    w2, b2 = params["conv2_w"], params["conv2_b"]
    y = lax.conv_general_dilated(x, w1, (1, 1), ((1, 1), (1, 1)),
                                 dimension_numbers=("NCHW", "OIHW", "NCHW"))
    y = jax.nn.relu(y + b1[None, :, None, None])
    y = lax.reduce_window(y, -jnp.inf, lax.max, (1, 1, 2, 2), (1, 1, 2, 2), "VALID")
    y = lax.conv_general_dilated(y, w2, (1, 1), ((1, 1), (1, 1)),
                                 dimension_numbers=("NCHW", "OIHW", "NCHW"))
    y = jax.nn.relu(y + b2[None, :, None, None])
    y = lax.reduce_window(y, -jnp.inf, lax.max, (1, 1, 2, 2), (1, 1, 2, 2), "VALID")
    y = y.reshape(y.shape[0], -1)
    y = jax.nn.relu(y @ params["fc1_w"].T + params["fc1_b"])
    return y @ params["fc2_w"].T + params["fc2_b"]


if __name__ == "__main__":
    key = jax.random.PRNGKey(0)
    keys = jax.random.split(key, 9)
    params = {
        "conv1_w": 0.1 * jax.random.normal(keys[0], (16, 5, 3, 3), jnp.float32),
        "conv1_b": 0.1 * jax.random.normal(keys[1], (16,), jnp.float32),
        "conv2_w": 0.1 * jax.random.normal(keys[2], (32, 16, 3, 3), jnp.float32),
        "conv2_b": 0.1 * jax.random.normal(keys[3], (32,), jnp.float32),
        "fc1_w": 0.1 * jax.random.normal(keys[4], (64, 32), jnp.float32),
        "fc1_b": 0.1 * jax.random.normal(keys[5], (64,), jnp.float32),
        "fc2_w": 0.1 * jax.random.normal(keys[6], (6, 64), jnp.float32),
        "fc2_b": 0.1 * jax.random.normal(keys[7], (6,), jnp.float32),
    }
    # fc1 expects 32*1*1 features, so the input spatial size must be 4x4
    # (two 2x2 max-pools: 4 -> 2 -> 1).
    x = jax.random.normal(keys[8], (2, 5, 4, 4), jnp.float32)

    out = jax.block_until_ready(urban_scene_cnn_forward(x, params))
    ref = jax.block_until_ready(reference_forward(x, params))
    assert out.shape == (2, 6), out.shape
    assert jnp.allclose(out, ref, atol=1e-3, rtol=1e-3), (out, ref)

    # bf16 compute path (recommended on v5e/v6e/v7x: halves HBM/VMEM traffic,
    # f32 accumulation on the MXU; output is bf16 and cast back after slicing).
    out_bf16 = jax.block_until_ready(
        urban_scene_cnn_forward(x, params, compute_dtype=jnp.bfloat16))
    assert out_bf16.shape == (2, 6), out_bf16.shape
    assert jnp.allclose(out_bf16, ref, atol=5e-2, rtol=5e-2), (out_bf16, ref)

    print("KERNEL_OK")
</pallas_src>

<mosaic_0001>
module attributes {stable_mosaic.version = 11 : i64} {
  func.func @_fused_cnn_kernel(%arg0: i32, %arg1: memref<16x80xf32, #tpu.memory_space<vmem>>, %arg2: memref<80x256xf32, #tpu.memory_space<vmem>>, %arg3: memref<1x256xf32, #tpu.memory_space<vmem>>, %arg4: memref<64x128xf32, #tpu.memory_space<vmem>>, %arg5: memref<1x128xf32, #tpu.memory_space<vmem>>, %arg6: memref<32x64xf32, #tpu.memory_space<vmem>>, %arg7: memref<1x64xf32, #tpu.memory_space<vmem>>, %arg8: memref<64x8xf32, #tpu.memory_space<vmem>>, %arg9: memref<1x8xf32, #tpu.memory_space<vmem>>, %arg10: memref<16x8xf32, #tpu.memory_space<vmem>>) attributes {dimension_semantics = [#tpu.dimension_semantics<parallel>], iteration_bounds = array<i64: 1>, scalar_prefetch = 0 : i64, scratch_operands = 0 : i64, tpu.core_type = #tpu.core_type<tc>, window_params = [{transform_indices = @transform_0, window_bounds = array<i64: 16, 80>}, {pipeline_mode = #tpu.pipeline_mode<synchronous>, transform_indices = @transform_1, window_bounds = array<i64: 80, 256>}, {pipeline_mode = #tpu.pipeline_mode<synchronous>, transform_indices = @transform_2, window_bounds = array<i64: 1, 256>}, {pipeline_mode = #tpu.pipeline_mode<synchronous>, transform_indices = @transform_3, window_bounds = array<i64: 64, 128>}, {pipeline_mode = #tpu.pipeline_mode<synchronous>, transform_indices = @transform_4, window_bounds = array<i64: 1, 128>}, {pipeline_mode = #tpu.pipeline_mode<synchronous>, transform_indices = @transform_5, window_bounds = array<i64: 32, 64>}, {pipeline_mode = #tpu.pipeline_mode<synchronous>, transform_indices = @transform_6, window_bounds = array<i64: 1, 64>}, {pipeline_mode = #tpu.pipeline_mode<synchronous>, transform_indices = @transform_7, window_bounds = array<i64: 64, 8>}, {pipeline_mode = #tpu.pipeline_mode<synchronous>, transform_indices = @transform_8, window_bounds = array<i64: 1, 8>}, {transform_indices = @transform_9, window_bounds = array<i64: 16, 8>}]} {
    %c0 = arith.constant 0 : index
    %c0_0 = arith.constant 0 : index
    %0 = vector.load %arg1[%c0, %c0_0] : memref<16x80xf32, #tpu.memory_space<vmem>>, vector<16x80xf32>
    %c0_1 = arith.constant 0 : index
    %c0_2 = arith.constant 0 : index
    %1 = vector.load %arg2[%c0_1, %c0_2] : memref<80x256xf32, #tpu.memory_space<vmem>>, vector<80x256xf32>
    %cst = arith.constant dense<0.000000e+00> : vector<16x256xf32>
    %2 = tpu.matmul %0, %1, %cst {dimension_numbers = #tpu.dot_dimension_numbers<[1], [0], [0], [1], [0, 0, 1, 1], [], []>} : vector<16x80xf32>, vector<80x256xf32>, vector<16x256xf32> -> vector<16x256xf32>
    %c0_3 = arith.constant 0 : index
    %c0_4 = arith.constant 0 : index
    %3 = vector.load %arg3[%c0_3, %c0_4] : memref<1x256xf32, #tpu.memory_space<vmem>>, vector<1x256xf32>
    %4 = vector.broadcast %3 : vector<1x256xf32> to vector<16x256xf32>
    %5 = arith.addf %2, %4 : vector<16x256xf32>
    %cst_5 = arith.constant 0.000000e+00 : f32
    %6 = vector.broadcast %cst_5 : f32 to vector<16x256xf32>
    %7 = arith.maximumf %5, %6 : vector<16x256xf32>
    %8 = vector.extract_strided_slice %7 {offsets = [0, 0], sizes = [16, 64], strides = [1, 1]} : vector<16x256xf32> to vector<16x64xf32>
    %9 = vector.extract_strided_slice %7 {offsets = [0, 64], sizes = [16, 64], strides = [1, 1]} : vector<16x256xf32> to vector<16x64xf32>
    %10 = arith.maximumf %8, %9 : vector<16x64xf32>
    %11 = vector.extract_strided_slice %7 {offsets = [0, 128], sizes = [16, 64], strides = [1, 1]} : vector<16x256xf32> to vector<16x64xf32>
    %12 = vector.extract_strided_slice %7 {offsets = [0, 192], sizes = [16, 64], strides = [1, 1]} : vector<16x256xf32> to vector<16x64xf32>
    %13 = arith.maximumf %11, %12 : vector<16x64xf32>
    %14 = arith.maximumf %10, %13 : vector<16x64xf32>
    %c0_6 = arith.constant 0 : index
    %c0_7 = arith.constant 0 : index
    %15 = vector.load %arg4[%c0_6, %c0_7] : memref<64x128xf32, #tpu.memory_space<vmem>>, vector<64x128xf32>
    %cst_8 = arith.constant dense<0.000000e+00> : vector<16x128xf32>
    %16 = tpu.matmul %14, %15, %cst_8 {dimension_numbers = #tpu.dot_dimension_numbers<[1], [0], [0], [1], [0, 0, 1, 1], [], []>} : vector<16x64xf32>, vector<64x128xf32>, vector<16x128xf32> -> vector<16x128xf32>
    %c0_9 = arith.constant 0 : index
    %c0_10 = arith.constant 0 : index
    %17 = vector.load %arg5[%c0_9, %c0_10] : memref<1x128xf32, #tpu.memory_space<vmem>>, vector<1x128xf32>
    %18 = vector.broadcast %17 : vector<1x128xf32> to vector<16x128xf32>
    %19 = arith.addf %16, %18 : vector<16x128xf32>
    %cst_11 = arith.constant 0.000000e+00 : f32
    %20 = vector.broadcast %cst_11 : f32 to vector<16x128xf32>
    %21 = arith.maximumf %19, %20 : vector<16x128xf32>
    %22 = vector.extract_strided_slice %21 {offsets = [0, 0], sizes = [16, 32], strides = [1, 1]} : vector<16x128xf32> to vector<16x32xf32>
    %23 = vector.extract_strided_slice %21 {offsets = [0, 32], sizes = [16, 32], strides = [1, 1]} : vector<16x128xf32> to vector<16x32xf32>
    %24 = arith.maximumf %22, %23 : vector<16x32xf32>
    %25 = vector.extract_strided_slice %21 {offsets = [0, 64], sizes = [16, 32], strides = [1, 1]} : vector<16x128xf32> to vector<16x32xf32>
    %26 = vector.extract_strided_slice %21 {offsets = [0, 96], sizes = [16, 32], strides = [1, 1]} : vector<16x128xf32> to vector<16x32xf32>
    %27 = arith.maximumf %25, %26 : vector<16x32xf32>
    %28 = arith.maximumf %24, %27 : vector<16x32xf32>
    %c0_12 = arith.constant 0 : index
    %c0_13 = arith.constant 0 : index
    %29 = vector.load %arg6[%c0_12, %c0_13] : memref<32x64xf32, #tpu.memory_space<vmem>>, vector<32x64xf32>
    %cst_14 = arith.constant dense<0.000000e+00> : vector<16x64xf32>
    %30 = tpu.matmul %28, %29, %cst_14 {dimension_numbers = #tpu.dot_dimension_numbers<[1], [0], [0], [1], [0, 0, 1, 1], [], []>} : vector<16x32xf32>, vector<32x64xf32>, vector<16x64xf32> -> vector<16x64xf32>
    %c0_15 = arith.constant 0 : index
    %c0_16 = arith.constant 0 : index
    %31 = vector.load %arg7[%c0_15, %c0_16] : memref<1x64xf32, #tpu.memory_space<vmem>>, vector<1x64xf32>
    %32 = vector.broadcast %31 : vector<1x64xf32> to vector<16x64xf32>
    %33 = arith.addf %30, %32 : vector<16x64xf32>
    %cst_17 = arith.constant 0.000000e+00 : f32
    %34 = vector.broadcast %cst_17 : f32 to vector<16x64xf32>
    %35 = arith.maximumf %33, %34 : vector<16x64xf32>
    %c0_18 = arith.constant 0 : index
    %c0_19 = arith.constant 0 : index
    %36 = vector.load %arg8[%c0_18, %c0_19] : memref<64x8xf32, #tpu.memory_space<vmem>>, vector<64x8xf32>
    %cst_20 = arith.constant dense<0.000000e+00> : vector<16x8xf32>
    %37 = tpu.matmul %35, %36, %cst_20 {dimension_numbers = #tpu.dot_dimension_numbers<[1], [0], [0], [1], [0, 0, 1, 1], [], []>} : vector<16x64xf32>, vector<64x8xf32>, vector<16x8xf32> -> vector<16x8xf32>
    %c0_21 = arith.constant 0 : index
    %c0_22 = arith.constant 0 : index
    %38 = vector.load %arg9[%c0_21, %c0_22] : memref<1x8xf32, #tpu.memory_space<vmem>>, vector<1x8xf32>
    %39 = vector.broadcast %38 : vector<1x8xf32> to vector<16x8xf32>
    %40 = arith.addf %37, %39 : vector<16x8xf32>
    %c0_23 = arith.constant 0 : index
    %c0_24 = arith.constant 0 : index
    %41 = vector.load %arg10[%c0_23, %c0_24] : memref<16x8xf32, #tpu.memory_space<vmem>>, vector<16x8xf32>
    tpu.vector_store %arg10[%c0_23, %c0_24], %40 {strides = array<i32>} : memref<16x8xf32, #tpu.memory_space<vmem>>, vector<16x8xf32>,
    return
  }
  func.func @transform_0(%arg0: i32) -> (i32, i32) {
    %c0_i32 = arith.constant 0 : i32
    %c0_i32_0 = arith.constant 0 : i32
    return %arg0, %c0_i32 : i32, i32
  }
  func.func @transform_1(%arg0: i32) -> (i32, i32) {
    %c0_i32 = arith.constant 0 : i32
    %c0_i32_0 = arith.constant 0 : i32
    %c0_i32_1 = arith.constant 0 : i32
    return %c0_i32, %c0_i32_0 : i32, i32
  }
  func.func @transform_2(%arg0: i32) -> (i32, i32) {
    %c0_i32 = arith.constant 0 : i32
    %c0_i32_0 = arith.constant 0 : i32
    %c0_i32_1 = arith.constant 0 : i32
    return %c0_i32, %c0_i32_0 : i32, i32
  }
  func.func @transform_3(%arg0: i32) -> (i32, i32) {
    %c0_i32 = arith.constant 0 : i32
    %c0_i32_0 = arith.constant 0 : i32
    %c0_i32_1 = arith.constant 0 : i32
    return %c0_i32, %c0_i32_0 : i32, i32
  }
  func.func @transform_4(%arg0: i32) -> (i32, i32) {
    %c0_i32 = arith.constant 0 : i32
    %c0_i32_0 = arith.constant 0 : i32
    %c0_i32_1 = arith.constant 0 : i32
    return %c0_i32, %c0_i32_0 : i32, i32
  }
  func.func @transform_5(%arg0: i32) -> (i32, i32) {
    %c0_i32 = arith.constant 0 : i32
    %c0_i32_0 = arith.constant 0 : i32
    %c0_i32_1 = arith.constant 0 : i32
    return %c0_i32, %c0_i32_0 : i32, i32
  }
  func.func @transform_6(%arg0: i32) -> (i32, i32) {
    %c0_i32 = arith.constant 0 : i32
    %c0_i32_0 = arith.constant 0 : i32
    %c0_i32_1 = arith.constant 0 : i32
    return %c0_i32, %c0_i32_0 : i32, i32
  }
  func.func @transform_7(%arg0: i32) -> (i32, i32) {
    %c0_i32 = arith.constant 0 : i32
    %c0_i32_0 = arith.constant 0 : i32
    %c0_i32_1 = arith.constant 0 : i32
    return %c0_i32, %c0_i32_0 : i32, i32
  }
  func.func @transform_8(%arg0: i32) -> (i32, i32) {
    %c0_i32 = arith.constant 0 : i32
    %c0_i32_0 = arith.constant 0 : i32
    %c0_i32_1 = arith.constant 0 : i32
    return %c0_i32, %c0_i32_0 : i32, i32
  }
  func.func @transform_9(%arg0: i32) -> (i32, i32) {
    %c0_i32 = arith.constant 0 : i32
    %c0_i32_0 = arith.constant 0 : i32
    return %arg0, %c0_i32 : i32, i32
  }
}

</mosaic_0001>

<llo_original>
// kernel: tile.13
$region0: #{tile.13}
  #allocation0 [shape = 's32[1]{0}', space=sflag, size = 0x4, scoped, tag = 'scoped memory for tile.13']
  %s0 = inlined_call_operand.vmem [shape: f32[16], index: 0, kind: input, shape index: {}]
  %s1 = inlined_call_operand.vmem [shape: f32[16,16], index: 1, kind: output, shape index: {}]
  // Predicated region
  $region2: #{tile.13} parent=0 // pred_check
    _
  $region3: #{tile.13} parent=0 // pred_check_branch
    %3 = sbr.rel (0) target = $region5
  $region4: #{tile.13} parent=0 // pred_region
    _
  $region5: #{tile.13} parent=0 // pred_fallthru
    _
  %v4 = vld [vmem:[%s0] ss:$0 sm:$0xff]
  %5 = vst [vmem:[%s1] sm:$0xff] %v4
  %s6 = scalar_lea.vmem %s1, 8
  %7 = vst [vmem:[%s6] sm:$0xff] %v4

// kernel: tile.14
$region0: #{tile.14}
  %s0 = inlined_call_operand.vmem [shape: f32[16,16], index: 0, kind: input, shape index: {}]
  %s1 = inlined_call_operand.vmem [shape: f32[1,256], index: 1, kind: output, shape index: {}]
  $region1: #{tile.14} parent=0
    #allocation0 [shape = 'u8[8192]{0}', space=vmem, size = 0x2000, scoped, tag = 'scoped mem for output reshape']
    %s2 = smov 3
    %v3 = vld [vmem:[%s0] ss:$8 sm:%s2]
    %vm4 = vcmask 130048
    %5 = vst.msk [vmem:[#allocation0] ss:$8 sm:$0x3] %vm4, %v3
    %s6 = scalar_lea.vmem %s0, 7
    %s7 = smov 3
    %v8 = vld [vmem:[%s6] ss:$8 sm:%s7]
    %9 = vrot.lane.b32.xlu0 %v8, 112
    %v10 = vpop.permute.xlu0 %9
    %vm11 = vcmask 1048448
    %12 = vst.msk [vmem:[#allocation0] ss:$8 sm:$0x3] %vm11, %v10
    %s13 = scalar_lea.vmem %s0, 6
    %s14 = smov 3
    %v15 = vld [vmem:[%s13] ss:$8 sm:%s14]
    %16 = vrot.lane.b32.xlu0 %v15, 96
    %v17 = vpop.permute.xlu0 %16
    %vm18 = vcmask 917248
    %19 = vst.msk [vmem:[#allocation0] ss:$8 sm:$0x3] %vm18, %v17
    %s20 = scalar_lea.vmem %s0, 5
    %s21 = smov 3
    %v22 = vld [vmem:[%s20] ss:$8 sm:%s21]
    %23 = vrot.lane.b32.xlu0 %v22, 80
    %v24 = vpop.permute.xlu0 %23
    %vm25 = vcmask 786048
    %26 = vst.msk [vmem:[#allocation0] ss:$8 sm:$0x3] %vm25, %v24
    %s27 = scalar_lea.vmem %s0, 4
    %s28 = smov 3
    %v29 = vld [vmem:[%s27] ss:$8 sm:%s28]
    %30 = vrot.lane.b32.xlu0 %v29, 64
    %v31 = vpop.permute.xlu0 %30
    %vm32 = vcmask 654848
    %33 = vst.msk [vmem:[#allocation0] ss:$8 sm:$0x3] %vm32, %v31
    %s34 = scalar_lea.vmem %s0, 3
    %s35 = smov 3
    %v36 = vld [vmem:[%s34] ss:$8 sm:%s35]
    %37 = vrot.lane.b32.xlu0 %v36, 48
    %v38 = vpop.permute.xlu0 %37
    %vm39 = vcmask 523648
    %40 = vst.msk [vmem:[#allocation0] ss:$8 sm:$0x3] %vm39, %v38
    %s41 = scalar_lea.vmem %s0, 2
    %s42 = smov 3
    %v43 = vld [vmem:[%s41] ss:$8 sm:%s42]
    %44 = vrot.lane.b32.xlu0 %v43, 32
    %v45 = vpop.permute.xlu0 %44
    %vm46 = vcmask 392448
    %47 = vst.msk [vmem:[#allocation0] ss:$8 sm:$0x3] %vm46, %v45
    %s48 = scalar_lea.vmem %s0, 1
    %s49 = smov 3
    %v50 = vld [vmem:[%s48] ss:$8 sm:%s49]
    %51 = vrot.lane.b32.xlu0 %v50, 16
    %v52 = vpop.permute.xlu0 %51
    %vm53 = vcmask 261248
    %54 = vst.msk [vmem:[#allocation0] ss:$8 sm:$0x3] %vm53, %v52
    %s56 = ssub.s32 2, 1
    %v57 = vld [vmem:[#allocation0] sm:%s56]
    %s59 = ssub.s32 2, 1
    %60 = vst [vmem:[%s1] sm:%s59] %v57
    %s61 = scalar_lea.vmem [#allocation0], 8
    %v62 = vld [vmem:[%s61] sm:%s56]
    %s64 = ssub.s32 2, 1
    %s65 = scalar_lea.vmem %s1, 1
    %66 = vst [vmem:[%s65] sm:%s64] %v62

// kernel: tile.18
$region0: #{tile.18}
  #allocation0 [shape = 's32[1]{0}', space=sflag, size = 0x4, scoped, tag = 'scoped memory for tile.18']
  %s0 = inlined_call_operand.vmem [shape: f32[32], index: 0, kind: input, shape index: {}]
  %s1 = inlined_call_operand.vmem [shape: f32[4,32], index: 1, kind: output, shape index: {}]
  // Predicated region
  $region2: #{tile.18} parent=0 // pred_check
    _
  $region3: #{tile.18} parent=0 // pred_check_branch
    %3 = sbr.rel (0) target = $region5
  $region4: #{tile.18} parent=0 // pred_region
    _
  $region5: #{tile.18} parent=0 // pred_fallthru
    _
  %v4 = vld [vmem:[%s0] ss:$0 sm:$0xff]
  %5 = vst [vmem:[%s1] sm:$0xf] %v4

// kernel: tile.19
$region0: #{tile.19}
  %s0 = inlined_call_operand.vmem [shape: f32[4,32], index: 0, kind: input, shape index: {}]
  %s1 = inlined_call_operand.vmem [shape: f32[1,128], index: 1, kind: output, shape index: {}]
  $region1: #{tile.19} parent=0
    #allocation0 [shape = 'u8[4096]{0}', space=vmem, size = 0x1000, scoped, tag = 'scoped mem for output reshape']
    #allocation1 [shape = 'u8[4096]{0}', space=vmem, size = 0x1000, scoped, tag = 'scoped mem for input reshape']
    %s3 = ssub.s32 16, 1
    %v4 = vld [vmem:[%s0] sm:%s3]
    %5 = vst [vmem:[#allocation1] sm:%s3] %v4
    %v6 = vld [vmem:[#allocation1] sm:$0x1]
    %vm7 = vcmask 261120
    %8 = vst.msk [vmem:[#allocation0] sm:$0x1] %vm7, %v6
    %s9 = scalar_lea.vmem [#allocation1], 3
    %v10 = vld [vmem:[%s9] sm:$0x1]
    %11 = vrot.lane.b32.xlu0 %v10, 96
    %v12 = vpop.permute.xlu0 %11
    %vm13 = vcmask 1048320
    %14 = vst.msk [vmem:[#allocation0] sm:$0x1] %vm13, %v12
    %s15 = scalar_lea.vmem [#allocation1], 2
    %v16 = vld [vmem:[%s15] sm:$0x1]
    %17 = vrot.lane.b32.xlu0 %v16, 64
    %v18 = vpop.permute.xlu0 %17
    %vm19 = vcmask 785920
    %20 = vst.msk [vmem:[#allocation0] sm:$0x1] %vm19, %v18
    %s21 = scalar_lea.vmem [#allocation1], 1
    %v22 = vld [vmem:[%s21] sm:$0x1]
    %23 = vrot.lane.b32.xlu0 %v22, 32
    %v24 = vpop.permute.xlu0 %23
    %vm25 = vcmask 523520
    %26 = vst.msk [vmem:[#allocation0] sm:$0x1] %vm25, %v24
    %s28 = ssub.s32 2, 1
    %v29 = vld [vmem:[#allocation0] sm:%s28]
    %s31 = ssub.s32 2, 1
    %32 = vst [vmem:[%s1] sm:%s31] %v29

// kernel: urban_scene_cnn_forward.1
$region0: #{urban_scene_cnn_forward.1}
  #allocation0 [shape = 'u32[]', space=smem, size = 0x4, offset = 0x4, fixed_abs, tag = 'smem constant byte address 0x4 - core index']
  #allocation1 [shape = 'u32[72,128]{1,0:T(1,128)}', space=vmem, size = 0x9000, scoped, tag = 'internal scratch']
  %s0 = inlined_call_operand.vmem [shape: f32[16,80], index: 0, kind: input, shape index: {}]
  %s1 = inlined_call_operand.vmem [shape: f32[80,256], index: 1, kind: input, shape index: {}]
  %s2 = inlined_call_operand.vmem [shape: f32[1,256], index: 2, kind: input, shape index: {}]
  %s3 = inlined_call_operand.vmem [shape: f32[64,128], index: 3, kind: input, shape index: {}]
  %s4 = inlined_call_operand.vmem [shape: f32[1,128], index: 4, kind: input, shape index: {}]
  %s5 = inlined_call_operand.vmem [shape: f32[32,64], index: 5, kind: input, shape index: {}]
  %s6 = inlined_call_operand.vmem [shape: f32[1,64], index: 6, kind: input, shape index: {}]
  %s7 = inlined_call_operand.vmem [shape: f32[64,8], index: 7, kind: input, shape index: {}]
  %s8 = inlined_call_operand.vmem [shape: f32[1,8], index: 8, kind: input, shape index: {}]
  %s9 = inlined_call_operand.vmem [shape: f32[16,8], index: 9, kind: output, shape index: {}]
  %s10 = sld [smem:[#allocation0]]
  $region46: #{urban_scene_cnn_forward.1} parent=0
    _
  %s12 = ssub.s32 1, %s10
  %s13 = scalar_select 0, %s12, %s10
  // Predicated region
  $region2: #{urban_scene_cnn_forward.1} parent=0 // pred_check
    _
  $region3: #{urban_scene_cnn_forward.1} parent=0 // pred_check_branch
    %15 = sbr.rel (0) target = $region5
  $region4: #{urban_scene_cnn_forward.1} parent=0 // pred_region
    _
  $region5: #{urban_scene_cnn_forward.1} parent=0 // pred_fallthru
    _
  // Predicated region
  $region6: #{urban_scene_cnn_forward.1} parent=0 // pred_check
    _
  $region7: #{urban_scene_cnn_forward.1} parent=0 // pred_check_branch
    %17 = sbr.rel (0) target = $region9
  $region8: #{urban_scene_cnn_forward.1} parent=0 // pred_region
    _
  $region9: #{urban_scene_cnn_forward.1} parent=0 // pred_fallthru
    _
  // Predicated region
  $region10: #{urban_scene_cnn_forward.1} parent=0 // pred_check
    _
  $region11: #{urban_scene_cnn_forward.1} parent=0 // pred_check_branch
    %19 = sbr.rel (0) target = $region13
  $region12: #{urban_scene_cnn_forward.1} parent=0 // pred_region
    _
  $region13: #{urban_scene_cnn_forward.1} parent=0 // pred_fallthru
    _
  // Predicated region
  $region14: #{urban_scene_cnn_forward.1} parent=0 // pred_check
    _
  $region15: #{urban_scene_cnn_forward.1} parent=0 // pred_check_branch
    %21 = sbr.rel (0) target = $region17
  $region16: #{urban_scene_cnn_forward.1} parent=0 // pred_region
    _
  $region17: #{urban_scene_cnn_forward.1} parent=0 // pred_fallthru
    _
  // Predicated region
  $region18: #{urban_scene_cnn_forward.1} parent=0 // pred_check
    _
  $region19: #{urban_scene_cnn_forward.1} parent=0 // pred_check_branch
    %23 = sbr.rel (0) target = $region21
  $region20: #{urban_scene_cnn_forward.1} parent=0 // pred_region
    _
  $region21: #{urban_scene_cnn_forward.1} parent=0 // pred_fallthru
    _
  // Predicated region
  $region22: #{urban_scene_cnn_forward.1} parent=0 // pred_check
    _
  $region23: #{urban_scene_cnn_forward.1} parent=0 // pred_check_branch
    %25 = sbr.rel (0) target = $region25
  $region24: #{urban_scene_cnn_forward.1} parent=0 // pred_region
    _
  $region25: #{urban_scene_cnn_forward.1} parent=0 // pred_fallthru
    _
  // Predicated region
  $region26: #{urban_scene_cnn_forward.1} parent=0 // pred_check
    _
  $region27: #{urban_scene_cnn_forward.1} parent=0 // pred_check_branch
    %27 = sbr.rel (0) target = $region29
  $region28: #{urban_scene_cnn_forward.1} parent=0 // pred_region
    _
  $region29: #{urban_scene_cnn_forward.1} parent=0 // pred_fallthru
    _
  // Predicated region
  $region30: #{urban_scene_cnn_forward.1} parent=0 // pred_check
    _
  $region31: #{urban_scene_cnn_forward.1} parent=0 // pred_check_branch
    %29 = sbr.rel (0) target = $region33
  $region32: #{urban_scene_cnn_forward.1} parent=0 // pred_region
    _
  $region33: #{urban_scene_cnn_forward.1} parent=0 // pred_fallthru
    _
  // Predicated region
  $region34: #{urban_scene_cnn_forward.1} parent=0 // pred_check
    _
  $region35: #{urban_scene_cnn_forward.1} parent=0 // pred_check_branch
    %31 = sbr.rel (0) target = $region37
  $region36: #{urban_scene_cnn_forward.1} parent=0 // pred_region
    _
  $region37: #{urban_scene_cnn_forward.1} parent=0 // pred_fallthru
    _
  %v32 = vld [vmem:[%s0] sm:$0xff]
  %v33 = vld [vmem:[%s0 + $0x8] sm:$0xff]
  %v34 = vld [vmem:[%s1] sm:$0xff]
  %v35 = vld [vmem:[%s1 + $0x8] sm:$0xff]
  %v36 = vld [vmem:[%s1 + $0x10] sm:$0xff]
  %v37 = vld [vmem:[%s1 + $0x18] sm:$0xff]
  %v38 = vld [vmem:[%s1 + $0x20] sm:$0xff]
  %v39 = vld [vmem:[%s1 + $0x28] sm:$0xff]
  %v40 = vld [vmem:[%s1 + $0x30] sm:$0xff]
  %v41 = vld [vmem:[%s1 + $0x38] sm:$0xff]
  %v42 = vld [vmem:[%s1 + $0x40] sm:$0xff]
  %v43 = vld [vmem:[%s1 + $0x48] sm:$0xff]
  %v44 = vld [vmem:[%s1 + $0x50] sm:$0xff]
  %v45 = vld [vmem:[%s1 + $0x58] sm:$0xff]
  %v46 = vld [vmem:[%s1 + $0x60] sm:$0xff]
  %v47 = vld [vmem:[%s1 + $0x68] sm:$0xff]
  %v48 = vld [vmem:[%s1 + $0x70] sm:$0xff]
  %v49 = vld [vmem:[%s1 + $0x78] sm:$0xff]
  %v50 = vld [vmem:[%s1 + $0x80] sm:$0xff]
  %v51 = vld [vmem:[%s1 + $0x88] sm:$0xff]
  %v52 = vld [vmem:[%s1 + $0x90] sm:$0xff]
  %v53 = vld [vmem:[%s1 + $0x98] sm:$0xff]
  %v54 = vld [vmem:[%s2] sm:$0x3]
  %v56 = vperm.slane %v54, 0
  %v57 = vperm.slane %v54, 1
  %vm60 = vcmask 654336
  %v62 = vsel %vm60, %v32, 0
  %v65 = vsel %vm60, %v33, 0
  %67 = vmatpush.msra.mxu0 0.0
  %68 = vmatpush.msra.mxu0 0.0
  %69 = vmatpush.msra.mxu0 0.0
  %70 = vmatpush.msra.mxu0 0.0
  %71 = vmatpush.msra.mxu0 0.0
  %72 = vmatpush.msra.mxu0 0.0
  %73 = vmatpush.msra.mxu0 %v52
  %74 = vmatpush.msra.mxu0 %v50
  %75 = vmatpush.msra.mxu0 %v48
  %76 = vmatpush.msra.mxu0 %v46
  %77 = vmatpush.msra.mxu0 %v44
  %78 = vmatpush.msra.mxu0 %v42
  %79 = vmatpush.msra.mxu0 %v40
  %80 = vmatpush.msra.mxu0 %v38
  %81 = vmatpush.msra.mxu0 %v36
  %82 = vmatpush.msra.mxu0 %v34
  %83 = vmatmul.f32.gmra.mxu0 %v62
  %v84 = vpop.f32.mrf.mxu0
  %v85 = vadd.f32 %v56, %v84
  %86 = vmatmul.f32.gmra.mxu0 %v65
  %v87 = vpop.f32.mrf.mxu0
  %v88 = vadd.f32 %v56, %v87
  %89 = vdwg.mxu0
  %90 = vmatpush.msra.mxu0 0.0
  %91 = vmatpush.msra.mxu0 0.0
  %92 = vmatpush.msra.mxu0 0.0
  %93 = vmatpush.msra.mxu0 0.0
  %94 = vmatpush.msra.mxu0 0.0
  %95 = vmatpush.msra.mxu0 0.0
  %96 = vmatpush.msra.mxu0 %v53
  %97 = vmatpush.msra.mxu0 %v51
  %98 = vmatpush.msra.mxu0 %v49
  %99 = vmatpush.msra.mxu0 %v47
  %100 = vmatpush.msra.mxu0 %v45
  %101 = vmatpush.msra.mxu0 %v43
  %102 = vmatpush.msra.mxu0 %v41
  %103 = vmatpush.msra.mxu0 %v39
  %104 = vmatpush.msra.mxu0 %v37
  %105 = vmatpush.msra.mxu0 %v35
  %106 = vmatmul.f32.gmra.mxu0 %v62
  %v107 = vpop.f32.mrf.mxu0
  %v108 = vadd.f32 %v57, %v107
  %109 = vmatmul.f32.gmra.mxu0 %v65
  %v110 = vpop.f32.mrf.mxu0
  %v111 = vadd.f32 %v57, %v110
  %112 = vdwg.mxu0
  %v113 = vmax.f32 %v85, 0.0
  %v114 = vmax.f32 %v108, 0.0
  %v115 = vmax.f32 %v88, 0.0
  %v116 = vmax.f32 %v111, 0.0
  %119 = vrot.lane.b32.xlu0 %v113, 64
  %v120 = vpop.permute.xlu0 %119
  %121 = vrot.lane.b32.xlu0 %v115, 64
  %v122 = vpop.permute.xlu0 %121
  %v125 = vmax.f32 %v113, %v120
  %v126 = vmax.f32 %v115, %v122
  %129 = vrot.lane.b32.xlu0 %v114, 64
  %v130 = vpop.permute.xlu0 %129
  %131 = vrot.lane.b32.xlu0 %v116, 64
  %v132 = vpop.permute.xlu0 %131
  %v135 = vmax.f32 %v114, %v130
  %v136 = vmax.f32 %v116, %v132
  %v137 = vmax.f32 %v125, %v135
  %v138 = vmax.f32 %v126, %v136
  %v139 = vld [vmem:[%s3] sm:$0xff]
  %v140 = vld [vmem:[%s3 + $0x8] sm:$0xff]
  %v141 = vld [vmem:[%s3 + $0x10] sm:$0xff]
  %v142 = vld [vmem:[%s3 + $0x18] sm:$0xff]
  %v143 = vld [vmem:[%s3 + $0x20] sm:$0xff]
  %v144 = vld [vmem:[%s3 + $0x28] sm:$0xff]
  %v145 = vld [vmem:[%s3 + $0x30] sm:$0xff]
  %v146 = vld [vmem:[%s3 + $0x38] sm:$0xff]
  %v147 = vld [vmem:[%s4] sm:$0x1]
  %v149 = vperm.slane %v147, 0
  %vm151 = vcmask 523264
  %v153 = vsel %vm151, %v137, 0
  %v156 = vsel %vm151, %v138, 0
  %158 = vmatpush.msra.mxu0 0.0
  %159 = vmatpush.msra.mxu0 0.0
  %160 = vmatpush.msra.mxu0 0.0
  %161 = vmatpush.msra.mxu0 0.0
  %162 = vmatpush.msra.mxu0 0.0
  %163 = vmatpush.msra.mxu0 0.0
  %164 = vmatpush.msra.mxu0 0.0
  %165 = vmatpush.msra.mxu0 0.0
  %166 = vmatpush.msra.mxu0 %v146
  %167 = vmatpush.msra.mxu0 %v145
  %168 = vmatpush.msra.mxu0 %v144
  %169 = vmatpush.msra.mxu0 %v143
  %170 = vmatpush.msra.mxu0 %v142
  %171 = vmatpush.msra.mxu0 %v141
  %172 = vmatpush.msra.mxu0 %v140
  %173 = vmatpush.msra.mxu0 %v139
  %174 = vmatmul.f32.gmra.mxu0 %v153
  %v175 = vpop.f32.mrf.mxu0
  %v176 = vadd.f32 %v149, %v175
  %177 = vmatmul.f32.gmra.mxu0 %v156
  %v178 = vpop.f32.mrf.mxu0
  %v179 = vadd.f32 %v149, %v178
  %180 = vdwg.mxu0
  %v181 = vmax.f32 %v176, 0.0
  %v182 = vmax.f32 %v179, 0.0
  %185 = vrot.lane.b32.xlu0 %v181, 96
  %v186 = vpop.permute.xlu0 %185
  %187 = vrot.lane.b32.xlu0 %v182, 96
  %v188 = vpop.permute.xlu0 %187
  %v191 = vmax.f32 %v181, %v186
  %v192 = vmax.f32 %v182, %v188
  %195 = vrot.lane.b32.xlu0 %v191, 64
  %v196 = vpop.permute.xlu0 %195
  %197 = vrot.lane.b32.xlu0 %v192, 64
  %v198 = vpop.permute.xlu0 %197
  %v201 = vmax.f32 %v191, %v196
  %v202 = vmax.f32 %v192, %v198
  %v203 = vld [vmem:[%s5] sm:$0xff]
  %v204 = vld [vmem:[%s5 + $0x8] sm:$0xff]
  %v205 = vld [vmem:[%s5 + $0x10] sm:$0xff]
  %v206 = vld [vmem:[%s5 + $0x18] sm:$0xff]
  %v207 = vld [vmem:[%s6] sm:$0x1]
  %v209 = vperm.slane %v207, 0
  %vm211 = vcmask 261120
  %v213 = vsel %vm211, %v201, 0
  %v216 = vsel %vm211, %v202, 0
  %218 = vmatpush.msra.mxu0 0.0
  %219 = vmatpush.msra.mxu0 0.0
  %220 = vmatpush.msra.mxu0 0.0
  %221 = vmatpush.msra.mxu0 0.0
  %222 = vmatpush.msra.mxu0 0.0
  %223 = vmatpush.msra.mxu0 0.0
  %224 = vmatpush.msra.mxu0 0.0
  %225 = vmatpush.msra.mxu0 0.0
  %226 = vmatpush.msra.mxu0 0.0
  %227 = vmatpush.msra.mxu0 0.0
  %228 = vmatpush.msra.mxu0 0.0
  %229 = vmatpush.msra.mxu0 0.0
  %230 = vmatpush.msra.mxu0 %v206
  %231 = vmatpush.msra.mxu0 %v205
  %232 = vmatpush.msra.mxu0 %v204
  %233 = vmatpush.msra.mxu0 %v203
  %234 = vmatmul.f32.gmra.mxu0 %v213
  %v235 = vpop.f32.mrf.mxu0
  %v236 = vadd.f32 %v209, %v235
  %237 = vmatmul.f32.gmra.mxu0 %v216
  %v238 = vpop.f32.mrf.mxu0
  %v239 = vadd.f32 %v209, %v238
  %240 = vdwg.mxu0
  %v241 = vmax.f32 %v236, 0.0
  %v242 = vmax.f32 %v239, 0.0
  %v243 = vld [vmem:[%s7] sm:$0xff]
  %v244 = vld [vmem:[%s7 + $0x8] sm:$0xff]
  %v245 = vld [vmem:[%s7 + $0x10] sm:$0xff]
  %v246 = vld [vmem:[%s7 + $0x18] sm:$0xff]
  %v247 = vld [vmem:[%s7 + $0x20] sm:$0xff]
  %v248 = vld [vmem:[%s7 + $0x28] sm:$0xff]
  %v249 = vld [vmem:[%s7 + $0x30] sm:$0xff]
  %v250 = vld [vmem:[%s7 + $0x38] sm:$0xff]
  %v251 = vld [vmem:[%s8] sm:$0x1]
  %v253 = vperm.slane %v251, 0
  %v256 = vsel %vm151, %v241, 0
  %v259 = vsel %vm151, %v242, 0
  %261 = vmatpush.msra.mxu0 0.0
  %262 = vmatpush.msra.mxu0 0.0
  %263 = vmatpush.msra.mxu0 0.0
  %264 = vmatpush.msra.mxu0 0.0
  %265 = vmatpush.msra.mxu0 0.0
  %266 = vmatpush.msra.mxu0 0.0
  %267 = vmatpush.msra.mxu0 0.0
  %268 = vmatpush.msra.mxu0 0.0
  %269 = vmatpush.msra.mxu0 %v250
  %270 = vmatpush.msra.mxu0 %v249
  %271 = vmatpush.msra.mxu0 %v248
  %272 = vmatpush.msra.mxu0 %v247
  %273 = vmatpush.msra.mxu0 %v246
  %274 = vmatpush.msra.mxu0 %v245
  %275 = vmatpush.msra.mxu0 %v244
  %276 = vmatpush.msra.mxu0 %v243
  %277 = vmatmul.f32.gmra.mxu0 %v256
  %v278 = vpop.f32.mrf.mxu0
  %v279 = vadd.f32 %v253, %v278
  %280 = vmatmul.f32.gmra.mxu0 %v259
  %v281 = vpop.f32.mrf.mxu0
  %v282 = vadd.f32 %v253, %v281
  %283 = vdwg.mxu0
  %vm284 = vcmask 64512
  %285 = vst.msk [vmem:[%s9] sm:$0xff] %vm284, %v279
  %286 = vst.msk [vmem:[%s9 + $0x8] sm:$0xff] %vm284, %v282
  // Predicated region
  $region38: #{urban_scene_cnn_forward.1} parent=0 // pred_check
    _
  $region39: #{urban_scene_cnn_forward.1} parent=0 // pred_check_branch
    %288 = sbr.rel (0) target = $region41
  $region40: #{urban_scene_cnn_forward.1} parent=0 // pred_region
    _
  $region41: #{urban_scene_cnn_forward.1} parent=0 // pred_fallthru
    _
  // Predicated region
  $region42: #{urban_scene_cnn_forward.1} parent=0 // pred_check
    _
  $region43: #{urban_scene_cnn_forward.1} parent=0 // pred_check_branch
    %290 = sbr.rel (0) target = $region45
  $region44: #{urban_scene_cnn_forward.1} parent=0 // pred_region
    _
  $region45: #{urban_scene_cnn_forward.1} parent=0 // pred_fallthru
    _

</llo_original>
